<compile_context>
chip_gen: v5e
topology: v5e:2x2
jax: 0.10.0
libtpu: 0.0.40
codegen_flags: <defaults>
</compile_context>

<pallas_src>
import functools

import jax
import jax.numpy as jnp
from jax.experimental import pallas as pl
from jax.experimental.pallas import tpu as pltpu

_LANE = 128
_DEFAULT_BLOCK_BYTES = 6 * 1024 * 1024   # target bytes per block (per buffer)
_SPLIT_THRESHOLD_BYTES = 1 << 20         # force grid >= 2 above this size


def _sublane(dtype) -> int:
    # Native sublane tile: 8 rows for 4-byte, 16 for 2-byte, 32 for 1-byte dtypes.
    itemsize = jnp.dtype(dtype).itemsize
    return max(8, 32 // max(1, itemsize))


def _out_dtype(in_dtype):
    # torch true division: float stays float, integer/bool promotes to float32.
    if jnp.issubdtype(in_dtype, jnp.floating):
        return in_dtype
    return jnp.float32


def _round_up(v, m):
    return ((v + m - 1) // m) * m


def _scale_kernel(x_ref, o_ref, *, div):
    # Pure elementwise hot path: one VPU op per vreg. Integer inputs are cast
    # to the float output dtype before the divide.
    o_ref[...] = x_ref[...].astype(o_ref.dtype) / div


def scale_by_constant(x, divide_by, *, block_bytes=_DEFAULT_BLOCK_BYTES):
    """Pallas equivalent of ScaleByConstant.forward: x / divide_by.

    `divide_by` must be a static Python number (it is a module constructor
    constant in the PyTorch spec); it is baked into the kernel.
    """
    orig_shape = x.shape
    in_dtype = x.dtype
    out_dtype = _out_dtype(in_dtype)
    div = float(divide_by)
    n = x.size
    if n == 0:
        return x.astype(out_dtype)

    in_it = jnp.dtype(in_dtype).itemsize
    out_it = jnp.dtype(out_dtype).itemsize
    max_it = max(in_it, out_it)
    sub = max(_sublane(in_dtype), _sublane(out_dtype))
    cost = pl.CostEstimate(flops=n, transcendentals=0,
                           bytes_accessed=n * (in_it + out_it))
    kernel = functools.partial(_scale_kernel, div=div)

    # Widest lane width (multiple of 128) that divides the element count.
    lane_w = next((lw for lw in (1024, 512, 256, 128) if n % lw == 0), None)

    if lane_w is not None:
        # Lane-dense 2-D path (common case: NCHW image tensors are aligned).
        rows = n // lane_w
        if rows <= sub:
            tr = rows                                        # single full-dim block
        else:
            tr = min(max(block_bytes // (lane_w * max_it), sub), rows)
            tr = max(sub, (tr // sub) * sub)
            # v7x megacore: large inputs must split into >= 2 parallel blocks.
            if tr >= rows and rows * lane_w * max_it >= _SPLIT_THRESHOLD_BYTES:
                tr = max(sub, _round_up((rows + 1) // 2, sub))
        grid = (pl.cdiv(rows, tr),)
        in_blk = tr * lane_w * in_it
        out_blk = tr * lane_w * out_it
        vmem_limit = max(16 << 20, min(48 << 20, 2 * (in_blk + out_blk) + (4 << 20)))

        out2d = pl.pallas_call(
            kernel,
            out_shape=jax.ShapeDtypeStruct((rows, lane_w), out_dtype),
            grid_spec=pltpu.PrefetchScalarGridSpec(
                num_scalar_prefetch=0,
                grid=grid,
                in_specs=[pl.BlockSpec((tr, lane_w), lambda i: (i, 0))],
                out_specs=pl.BlockSpec((tr, lane_w), lambda i: (i, 0)),
            ),
            compiler_params=pltpu.CompilerParams(
                dimension_semantics=("parallel",),
                vmem_limit_bytes=int(vmem_limit),
            ),
            cost_estimate=cost,
        )(jnp.reshape(x, (rows, lane_w)))
        return out2d.reshape(orig_shape)

    # Unaligned fallback (n not a multiple of 128): run directly on the flat
    # array with a cdiv grid and a masked partial edge block. No jnp.pad in /
    # slice out, so no extra HBM passes.
    gran = sub * _LANE
    blk = max(gran, (block_bytes // (gran * max_it)) * gran)
    blk = min(blk, _round_up(n, gran))
    if blk >= n and n * max_it >= _SPLIT_THRESHOLD_BYTES:
        blk = max(gran, _round_up((n + 1) // 2, gran))
    grid = (pl.cdiv(n, blk),)
    vmem_limit = max(16 << 20, min(48 << 20, 2 * blk * (in_it + out_it) + (4 << 20)))

    out_flat = pl.pallas_call(
        kernel,
        out_shape=jax.ShapeDtypeStruct((n,), out_dtype),
        grid_spec=pltpu.PrefetchScalarGridSpec(
            num_scalar_prefetch=0,
            grid=grid,
            in_specs=[pl.BlockSpec((blk,), lambda i: (i,))],
            out_specs=pl.BlockSpec((blk,), lambda i: (i,)),
        ),
        compiler_params=pltpu.CompilerParams(
            dimension_semantics=("parallel",),
            vmem_limit_bytes=int(vmem_limit),
        ),
        cost_estimate=cost,
    )(jnp.reshape(x, (n,)))
    return out_flat.reshape(orig_shape)


if __name__ == "__main__":
    key = jax.random.PRNGKey(0)
    divide_by = 255.0

    # Primary check: NCHW float32 input at the spec's small shape.
    x = jax.random.normal(key, (2, 4, 16, 16), dtype=jnp.float32)
    y = scale_by_constant(x, divide_by)
    jax.block_until_ready(y)
    assert y.shape == x.shape and y.dtype == x.dtype
    assert jnp.allclose(y, x / divide_by, atol=1e-7, rtol=1e-6)

    # Multi-block path: grid of 2 with a masked partial edge block.
    x2 = jax.random.normal(jax.random.fold_in(key, 1), (2, 3, 64, 128),
                           dtype=jnp.float32)
    y2 = scale_by_constant(x2, divide_by, block_bytes=128 * 1024)
    jax.block_until_ready(y2)
    assert jnp.allclose(y2, x2 / divide_by, atol=1e-7, rtol=1e-6)

    # bfloat16 path (dtype-aware sublane tiling).
    x3 = jax.random.normal(jax.random.fold_in(key, 2), (2, 4, 16, 16),
                           dtype=jnp.bfloat16)
    y3 = scale_by_constant(x3, divide_by)
    jax.block_until_ready(y3)
    assert y3.dtype == jnp.bfloat16
    assert jnp.allclose(y3.astype(jnp.float32),
                        (x3 / divide_by).astype(jnp.float32),
                        atol=1e-2, rtol=1e-2)

    # Integer input promotes to float32 output (torch true-division semantics).
    x4 = jax.random.randint(jax.random.fold_in(key, 3), (2, 4, 16, 16), 0, 256,
                            dtype=jnp.int32)
    y4 = scale_by_constant(x4, divide_by)
    jax.block_until_ready(y4)
    assert y4.dtype == jnp.float32
    assert jnp.allclose(y4, x4.astype(jnp.float32) / divide_by,
                        atol=1e-7, rtol=1e-6)

    print("KERNEL_OK")
</pallas_src>

<mosaic_0001>
module attributes {stable_mosaic.version = 11 : i64} {
  func.func @_scale_kernel(%arg0: i32, %arg1: memref<2x1024xf32, #tpu.memory_space<vmem>>, %arg2: memref<2x1024xf32, #tpu.memory_space<vmem>>) attributes {dimension_semantics = [#tpu.dimension_semantics<parallel>], iteration_bounds = array<i64: 1>, scalar_prefetch = 0 : i64, scratch_operands = 0 : i64, tpu.core_type = #tpu.core_type<tc>, window_params = [{transform_indices = @transform_0, window_bounds = array<i64: 2, 1024>}, {transform_indices = @transform_1, window_bounds = array<i64: 2, 1024>}]} {
    %c0 = arith.constant 0 : index
    %c0_0 = arith.constant 0 : index
    %0 = vector.load %arg1[%c0, %c0_0] : memref<2x1024xf32, #tpu.memory_space<vmem>>, vector<2x1024xf32>
    %cst = arith.constant 2.550000e+02 : f32
    %1 = vector.broadcast %cst : f32 to vector<2x1024xf32>
    %2 = arith.divf %0, %1 : vector<2x1024xf32>
    %c0_1 = arith.constant 0 : index
    %c0_2 = arith.constant 0 : index
    %3 = vector.load %arg2[%c0_1, %c0_2] : memref<2x1024xf32, #tpu.memory_space<vmem>>, vector<2x1024xf32>
    tpu.vector_store %arg2[%c0_1, %c0_2], %2 {strides = array<i32>} : memref<2x1024xf32, #tpu.memory_space<vmem>>, vector<2x1024xf32>,
    return
  }
  func.func @transform_0(%arg0: i32) -> (i32, i32) {
    %c0_i32 = arith.constant 0 : i32
    %c0_i32_0 = arith.constant 0 : i32
    return %arg0, %c0_i32 : i32, i32
  }
  func.func @transform_1(%arg0: i32) -> (i32, i32) {
    %c0_i32 = arith.constant 0 : i32
    %c0_i32_0 = arith.constant 0 : i32
    return %arg0, %c0_i32 : i32, i32
  }
}

</mosaic_0001>

<llo_original>
// kernel: tpu_custom_call.1
$region0: #{tpu_custom_call.1}
  #allocation0 [shape = 'u32[]', space=smem, size = 0x4, offset = 0x4, fixed_abs, tag = 'smem constant byte address 0x4 - core index']
  #allocation1 [shape = 'u32[72,128]{1,0:T(1,128)}', space=vmem, size = 0x9000, scoped, tag = 'internal scratch']
  %s0 = inlined_call_operand.hbm [shape: f32[2,1024], index: 0, kind: input, shape index: {}]
  %s1 = inlined_call_operand.hbm [shape: f32[2,1024], index: 1, kind: output, shape index: {}]
  %s2 = sld [smem:[#allocation0]]
  $region18: #{tpu_custom_call.1} parent=0
    _
  %s4 = ssub.s32 1, %s2
  %s5 = scalar_select 0, %s4, %s2
  $region1: #{tpu_custom_call.1} parent=0
    #allocation2 [shape = 'u8[8192]{0}', space=vmem, size = 0x2000, scoped, tag = 'input window, operand 0, single buffered']
    #allocation3 [shape = 's32[1]{0}', space=sflag, size = 0x4, scoped, tag = 'scoped memory for tpu_custom_call.1']
    #allocation4 [shape = 's32[1]{0}', space=sflag, size = 0x4, scoped, tag = 'scoped memory for tpu_custom_call.1']
    #allocation5 [shape = 'u8[8192]{0}', space=vmem, size = 0x2000, scoped, tag = 'output window, operand 0, single buffered']
    %6 = vsyncpa [#allocation3], 0
    %7 = vsyncpa [#allocation4], 0
    // Predicated region
    $region2: #{tpu_custom_call.1} parent=1 // pred_check
      _
    $region3: #{tpu_custom_call.1} parent=1 // pred_check_branch
      %9 = sbr.rel (0) target = $region5
    $region4: #{tpu_custom_call.1} parent=1 // pred_region
      %11 = vsyncadd [#allocation3], 0
      %s13 = sshll.u32 %s0, 4
      %s14 = int_to_ptr.hbm [resolvable:$true] %s13
      %s15 = sshll.u32 [#allocation2], 4
      %s16 = int_to_ptr.vmem [resolvable:$true] %s15
      %18 = dma.hbm_to_vmem [thread:$0]  %s14, 256, %s16, [#allocation3]
    $region5: #{tpu_custom_call.1} parent=1 // pred_fallthru
      _
    // Predicated region
    $region6: #{tpu_custom_call.1} parent=1 // pred_check
      _
    $region7: #{tpu_custom_call.1} parent=1 // pred_check_branch
      %20 = sbr.rel (0) target = $region9
    $region8: #{tpu_custom_call.1} parent=1 // pred_region
      %22 = dma.done [#allocation3], 256
    $region9: #{tpu_custom_call.1} parent=1 // pred_fallthru
      _
    %v23 = vld [vmem:[#allocation2] sm:$0xff]
    %v24 = vld [vmem:[#allocation2 + $0x8] sm:$0xff]
    %v25 = vrcp.pop 255.0
    %v26 = vmul.f32 255.0, %v25
    %v27 = vsub.f32 1.0, %v26
    %v28 = vmul.f32 %v25, %v27
    %v29 = vadd.f32 %v25, %v28
    %vm30 = vweird.f32 %v25
    %v31 = vsel %vm30, %v25, %v29
    %v32 = vmul.f32 %v23, %v31
    %v33 = vmul.f32 %v24, %v31
    %34 = vst [vmem:[#allocation5] sm:$0xff] %v32
    %35 = vst [vmem:[#allocation5 + $0x8] sm:$0xff] %v33
    // Predicated region
    $region10: #{tpu_custom_call.1} parent=1 // pred_check
      _
    $region11: #{tpu_custom_call.1} parent=1 // pred_check_branch
      %37 = sbr.rel (0) target = $region13
    $region12: #{tpu_custom_call.1} parent=1 // pred_region
      %39 = vsyncadd [#allocation4], 0
      %s41 = sshll.u32 [#allocation5], 4
      %s42 = int_to_ptr.vmem [resolvable:$true] %s41
      %s43 = sshll.u32 %s1, 4
      %s44 = int_to_ptr.hbm [resolvable:$true] %s43
      %46 = dma.vmem_to_hbm [thread:$0]  %s42, 256, %s44, [#allocation4]
    $region13: #{tpu_custom_call.1} parent=1 // pred_fallthru
      _
    // Predicated region
    $region14: #{tpu_custom_call.1} parent=1 // pred_check
      _
    $region15: #{tpu_custom_call.1} parent=1 // pred_check_branch
      %48 = sbr.rel (0) target = $region17
    $region16: #{tpu_custom_call.1} parent=1 // pred_region
      %50 = dma.done [#allocation4], 256
    $region17: #{tpu_custom_call.1} parent=1 // pred_fallthru
      _
    %51 = vsyncpa [#allocation3], 1
    %52 = vsyncpa [#allocation4], 1

</llo_original>
